<compile_context>
chip_gen: v5e
topology: v5e:2x2
jax: 0.10.0
libtpu: 0.0.40
codegen_flags: <defaults>
</compile_context>

<pallas_src>
import jax
import jax.numpy as jnp
from jax import lax
from jax.experimental import pallas as pl
from jax.experimental.pallas import tpu as pltpu


def _round_up(n: int, m: int) -> int:
    return (n + m - 1) // m * m


def _rnn_fc_kernel(x_ref, w_ih_ref, w_hh_ref, b_ref, w_fc_ref, b_fc_ref,
                   out_ref, xw_ref):
    """x_ref: (seq*batch_p, in_p) time-major-flattened padded input.
    w_*_ref: (in, out)-oriented padded weights; b_*: (1, hidden_p).
    out_ref: (batch_p, hidden_p). xw_ref: (seq*batch_p, hidden_p) scratch."""
    batch_p, hidden_p = out_ref.shape
    seq = x_ref.shape[0] // batch_p          # static Python int

    # One big MXU pass: input projections for every timestep + fused bias.
    xw_ref[...] = (
        jnp.dot(x_ref[...], w_ih_ref[...], preferred_element_type=jnp.float32)
        + b_ref[...])

    w_hh = w_hh_ref[...]                     # hoist weight load out of the loop

    def step(t, h):
        off = pl.multiple_of(t * batch_p, batch_p)   # sublane-aligned slice
        pre = xw_ref[pl.ds(off, batch_p), :] + jnp.dot(
            h, w_hh, preferred_element_type=jnp.float32)
        return jnp.tanh(pre)

    h_last = lax.fori_loop(
        0, seq, step, jnp.zeros((batch_p, hidden_p), jnp.float32),
        unroll=True)

    # Fused fc head: out = h_T @ W_fc^T + b_fc
    out_ref[...] = (
        jnp.dot(h_last, w_fc_ref[...], preferred_element_type=jnp.float32)
        + b_fc_ref[...]).astype(out_ref.dtype)


def rnn_forward(x, w_ih, w_hh, b_ih, b_hh, w_fc, b_fc):
    """x: (batch, seq, input). Returns fc(h_T): (batch, hidden)."""
    batch, seq, in_dim = x.shape
    hidden = w_ih.shape[0]

    batch_p = _round_up(batch, 8)        # sublane multiple
    in_p = _round_up(in_dim, 128)        # lane multiple
    hidden_p = _round_up(hidden, 128)    # lane multiple (lane-dense output)

    f32 = jnp.float32

    # Time-major + zero-pad + flatten (seq, batch_p) -> rows.  At these sizes
    # the transpose fuses with the padding copy; for large inputs produce x
    # time-major upstream to avoid the extra HBM pass.
    x_p = jnp.zeros((seq, batch_p, in_p), f32)
    x_p = x_p.at[:, :batch, :in_dim].set(jnp.transpose(x.astype(f32), (1, 0, 2)))
    x_flat = x_p.reshape(seq * batch_p, in_p)

    # (in, out)-oriented, zero-padded weights; the two RNN biases are pre-fused.
    w_ih_p = jnp.zeros((in_p, hidden_p), f32).at[:in_dim, :hidden].set(
        w_ih.T.astype(f32))
    w_hh_p = jnp.zeros((hidden_p, hidden_p), f32).at[:hidden, :hidden].set(
        w_hh.T.astype(f32))
    b_p = jnp.zeros((1, hidden_p), f32).at[0, :hidden].set(
        (b_ih + b_hh).astype(f32))
    w_fc_p = jnp.zeros((hidden_p, hidden_p), f32).at[
        :w_fc.shape[1], :w_fc.shape[0]].set(w_fc.T.astype(f32))
    b_fc_p = jnp.zeros((1, hidden_p), f32).at[0, :b_fc.shape[0]].set(
        b_fc.astype(f32))

    # Single kernel invocation: whole (padded) operands live in VMEM.
    out_p = pl.pallas_call(
        _rnn_fc_kernel,
        out_shape=jax.ShapeDtypeStruct((batch_p, hidden_p), f32),
        scratch_shapes=[pltpu.VMEM((seq * batch_p, hidden_p), f32)],
    )(x_flat, w_ih_p, w_hh_p, b_p, w_fc_p, b_fc_p)

    return out_p[:batch, :hidden]


def rnn_reference(x, w_ih, w_hh, b_ih, b_hh, w_fc, b_fc):
    batch, seq, _ = x.shape
    hidden = w_ih.shape[0]
    h = jnp.zeros((batch, hidden), jnp.float32)
    for t in range(seq):
        h = jnp.tanh(x[:, t, :] @ w_ih.T + b_ih + h @ w_hh.T + b_hh)
    return h @ w_fc.T + b_fc


if __name__ == "__main__":
    # Small shapes consistent with the module; fc requires input == hidden.
    batch, seq, input_size, hidden_size = 2, 8, 32, 32

    key = jax.random.PRNGKey(0)
    ks = jax.random.split(key, 7)
    bound = 1.0 / jnp.sqrt(hidden_size)
    u = lambda k, shape: jax.random.uniform(k, shape, jnp.float32, -bound, bound)

    x = jax.random.normal(ks[0], (batch, seq, input_size), jnp.float32)
    w_ih = u(ks[1], (hidden_size, input_size))   # weight_ih_l0
    w_hh = u(ks[2], (hidden_size, hidden_size))  # weight_hh_l0
    b_ih = u(ks[3], (hidden_size,))
    b_hh = u(ks[4], (hidden_size,))
    w_fc = u(ks[5], (hidden_size, input_size))   # fc: Linear(input, hidden)
    b_fc = u(ks[6], (hidden_size,))

    out = jax.block_until_ready(
        rnn_forward(x, w_ih, w_hh, b_ih, b_hh, w_fc, b_fc))

    ref = rnn_reference(x, w_ih, w_hh, b_ih, b_hh, w_fc, b_fc)
    assert out.shape == (batch, hidden_size)
    assert jnp.allclose(out, ref, atol=2e-5, rtol=2e-5), (
        float(jnp.max(jnp.abs(out - ref))))
    print("KERNEL_OK")
</pallas_src>

<mosaic_0001>
module attributes {stable_mosaic.version = 11 : i64} {
  func.func @_rnn_fc_kernel(%arg0: memref<64x128xf32, #tpu.memory_space<vmem>>, %arg1: memref<128x128xf32, #tpu.memory_space<vmem>>, %arg2: memref<128x128xf32, #tpu.memory_space<vmem>>, %arg3: memref<1x128xf32, #tpu.memory_space<vmem>>, %arg4: memref<128x128xf32, #tpu.memory_space<vmem>>, %arg5: memref<1x128xf32, #tpu.memory_space<vmem>>, %arg6: memref<8x128xf32, #tpu.memory_space<vmem>>, %arg7: memref<64x128xf32, #tpu.memory_space<vmem>>) attributes {dimension_semantics = [], scalar_prefetch = 0 : i64, scratch_operands = 1 : i64, tpu.core_type = #tpu.core_type<tc>} {
    %c0 = arith.constant 0 : index
    %c0_0 = arith.constant 0 : index
    %0 = vector.load %arg0[%c0, %c0_0] : memref<64x128xf32, #tpu.memory_space<vmem>>, vector<64x128xf32>
    %c0_1 = arith.constant 0 : index
    %c0_2 = arith.constant 0 : index
    %1 = vector.load %arg1[%c0_1, %c0_2] : memref<128x128xf32, #tpu.memory_space<vmem>>, vector<128x128xf32>
    %cst = arith.constant dense<0.000000e+00> : vector<64x128xf32>
    %2 = tpu.matmul %0, %1, %cst {dimension_numbers = #tpu.dot_dimension_numbers<[1], [0], [0], [1], [0, 0, 1, 1], [], []>} : vector<64x128xf32>, vector<128x128xf32>, vector<64x128xf32> -> vector<64x128xf32>
    %c0_3 = arith.constant 0 : index
    %c0_4 = arith.constant 0 : index
    %3 = vector.load %arg3[%c0_3, %c0_4] : memref<1x128xf32, #tpu.memory_space<vmem>>, vector<1x128xf32>
    %4 = vector.broadcast %3 : vector<1x128xf32> to vector<64x128xf32>
    %5 = arith.addf %2, %4 : vector<64x128xf32>
    %c0_5 = arith.constant 0 : index
    %c0_6 = arith.constant 0 : index
    %6 = vector.load %arg7[%c0_5, %c0_6] : memref<64x128xf32, #tpu.memory_space<vmem>>, vector<64x128xf32>
    tpu.vector_store %arg7[%c0_5, %c0_6], %5 {strides = array<i32>} : memref<64x128xf32, #tpu.memory_space<vmem>>, vector<64x128xf32>,
    %c0_7 = arith.constant 0 : index
    %c0_8 = arith.constant 0 : index
    %7 = vector.load %arg2[%c0_7, %c0_8] : memref<128x128xf32, #tpu.memory_space<vmem>>, vector<128x128xf32>
    %cst_9 = arith.constant 0.000000e+00 : f32
    %8 = vector.broadcast %cst_9 : f32 to vector<8x128xf32>
    %c0_i32 = arith.constant 0 : i32
    %c8_i32 = arith.constant 8 : i32
    %9 = arith.muli %c0_i32, %c8_i32 : i32
    %10 = tpu.assume_multiple %9, 8 : i32
    %11 = arith.index_cast %10 : i32 to index
    %c0_10 = arith.constant 0 : index
    %12 = vector.load %arg7[%11, %c0_10] : memref<64x128xf32, #tpu.memory_space<vmem>>, vector<8x128xf32>
    %cst_11 = arith.constant dense<0.000000e+00> : vector<8x128xf32>
    %13 = tpu.matmul %8, %7, %cst_11 {dimension_numbers = #tpu.dot_dimension_numbers<[1], [0], [0], [1], [0, 0, 1, 1], [], []>} : vector<8x128xf32>, vector<128x128xf32>, vector<8x128xf32> -> vector<8x128xf32>
    %14 = arith.addf %12, %13 : vector<8x128xf32>
    %15 = math.tanh %14 : vector<8x128xf32>
    %c1_i32 = arith.constant 1 : i32
    %c8_i32_12 = arith.constant 8 : i32
    %16 = arith.muli %c1_i32, %c8_i32_12 : i32
    %17 = tpu.assume_multiple %16, 8 : i32
    %18 = arith.index_cast %17 : i32 to index
    %c0_13 = arith.constant 0 : index
    %19 = vector.load %arg7[%18, %c0_13] : memref<64x128xf32, #tpu.memory_space<vmem>>, vector<8x128xf32>
    %cst_14 = arith.constant dense<0.000000e+00> : vector<8x128xf32>
    %20 = tpu.matmul %15, %7, %cst_14 {dimension_numbers = #tpu.dot_dimension_numbers<[1], [0], [0], [1], [0, 0, 1, 1], [], []>} : vector<8x128xf32>, vector<128x128xf32>, vector<8x128xf32> -> vector<8x128xf32>
    %21 = arith.addf %19, %20 : vector<8x128xf32>
    %22 = math.tanh %21 : vector<8x128xf32>
    %c2_i32 = arith.constant 2 : i32
    %c8_i32_15 = arith.constant 8 : i32
    %23 = arith.muli %c2_i32, %c8_i32_15 : i32
    %24 = tpu.assume_multiple %23, 8 : i32
    %25 = arith.index_cast %24 : i32 to index
    %c0_16 = arith.constant 0 : index
    %26 = vector.load %arg7[%25, %c0_16] : memref<64x128xf32, #tpu.memory_space<vmem>>, vector<8x128xf32>
    %cst_17 = arith.constant dense<0.000000e+00> : vector<8x128xf32>
    %27 = tpu.matmul %22, %7, %cst_17 {dimension_numbers = #tpu.dot_dimension_numbers<[1], [0], [0], [1], [0, 0, 1, 1], [], []>} : vector<8x128xf32>, vector<128x128xf32>, vector<8x128xf32> -> vector<8x128xf32>
    %28 = arith.addf %26, %27 : vector<8x128xf32>
    %29 = math.tanh %28 : vector<8x128xf32>
    %c3_i32 = arith.constant 3 : i32
    %c8_i32_18 = arith.constant 8 : i32
    %30 = arith.muli %c3_i32, %c8_i32_18 : i32
    %31 = tpu.assume_multiple %30, 8 : i32
    %32 = arith.index_cast %31 : i32 to index
    %c0_19 = arith.constant 0 : index
    %33 = vector.load %arg7[%32, %c0_19] : memref<64x128xf32, #tpu.memory_space<vmem>>, vector<8x128xf32>
    %cst_20 = arith.constant dense<0.000000e+00> : vector<8x128xf32>
    %34 = tpu.matmul %29, %7, %cst_20 {dimension_numbers = #tpu.dot_dimension_numbers<[1], [0], [0], [1], [0, 0, 1, 1], [], []>} : vector<8x128xf32>, vector<128x128xf32>, vector<8x128xf32> -> vector<8x128xf32>
    %35 = arith.addf %33, %34 : vector<8x128xf32>
    %36 = math.tanh %35 : vector<8x128xf32>
    %c4_i32 = arith.constant 4 : i32
    %c8_i32_21 = arith.constant 8 : i32
    %37 = arith.muli %c4_i32, %c8_i32_21 : i32
    %38 = tpu.assume_multiple %37, 8 : i32
    %39 = arith.index_cast %38 : i32 to index
    %c0_22 = arith.constant 0 : index
    %40 = vector.load %arg7[%39, %c0_22] : memref<64x128xf32, #tpu.memory_space<vmem>>, vector<8x128xf32>
    %cst_23 = arith.constant dense<0.000000e+00> : vector<8x128xf32>
    %41 = tpu.matmul %36, %7, %cst_23 {dimension_numbers = #tpu.dot_dimension_numbers<[1], [0], [0], [1], [0, 0, 1, 1], [], []>} : vector<8x128xf32>, vector<128x128xf32>, vector<8x128xf32> -> vector<8x128xf32>
    %42 = arith.addf %40, %41 : vector<8x128xf32>
    %43 = math.tanh %42 : vector<8x128xf32>
    %c5_i32 = arith.constant 5 : i32
    %c8_i32_24 = arith.constant 8 : i32
    %44 = arith.muli %c5_i32, %c8_i32_24 : i32
    %45 = tpu.assume_multiple %44, 8 : i32
    %46 = arith.index_cast %45 : i32 to index
    %c0_25 = arith.constant 0 : index
    %47 = vector.load %arg7[%46, %c0_25] : memref<64x128xf32, #tpu.memory_space<vmem>>, vector<8x128xf32>
    %cst_26 = arith.constant dense<0.000000e+00> : vector<8x128xf32>
    %48 = tpu.matmul %43, %7, %cst_26 {dimension_numbers = #tpu.dot_dimension_numbers<[1], [0], [0], [1], [0, 0, 1, 1], [], []>} : vector<8x128xf32>, vector<128x128xf32>, vector<8x128xf32> -> vector<8x128xf32>
    %49 = arith.addf %47, %48 : vector<8x128xf32>
    %50 = math.tanh %49 : vector<8x128xf32>
    %c6_i32 = arith.constant 6 : i32
    %c8_i32_27 = arith.constant 8 : i32
    %51 = arith.muli %c6_i32, %c8_i32_27 : i32
    %52 = tpu.assume_multiple %51, 8 : i32
    %53 = arith.index_cast %52 : i32 to index
    %c0_28 = arith.constant 0 : index
    %54 = vector.load %arg7[%53, %c0_28] : memref<64x128xf32, #tpu.memory_space<vmem>>, vector<8x128xf32>
    %cst_29 = arith.constant dense<0.000000e+00> : vector<8x128xf32>
    %55 = tpu.matmul %50, %7, %cst_29 {dimension_numbers = #tpu.dot_dimension_numbers<[1], [0], [0], [1], [0, 0, 1, 1], [], []>} : vector<8x128xf32>, vector<128x128xf32>, vector<8x128xf32> -> vector<8x128xf32>
    %56 = arith.addf %54, %55 : vector<8x128xf32>
    %57 = math.tanh %56 : vector<8x128xf32>
    %c7_i32 = arith.constant 7 : i32
    %c8_i32_30 = arith.constant 8 : i32
    %58 = arith.muli %c7_i32, %c8_i32_30 : i32
    %59 = tpu.assume_multiple %58, 8 : i32
    %60 = arith.index_cast %59 : i32 to index
    %c0_31 = arith.constant 0 : index
    %61 = vector.load %arg7[%60, %c0_31] : memref<64x128xf32, #tpu.memory_space<vmem>>, vector<8x128xf32>
    %cst_32 = arith.constant dense<0.000000e+00> : vector<8x128xf32>
    %62 = tpu.matmul %57, %7, %cst_32 {dimension_numbers = #tpu.dot_dimension_numbers<[1], [0], [0], [1], [0, 0, 1, 1], [], []>} : vector<8x128xf32>, vector<128x128xf32>, vector<8x128xf32> -> vector<8x128xf32>
    %63 = arith.addf %61, %62 : vector<8x128xf32>
    %64 = math.tanh %63 : vector<8x128xf32>
    %c8_i32_33 = arith.constant 8 : i32
    %c0_34 = arith.constant 0 : index
    %c0_35 = arith.constant 0 : index
    %65 = vector.load %arg4[%c0_34, %c0_35] : memref<128x128xf32, #tpu.memory_space<vmem>>, vector<128x128xf32>
    %cst_36 = arith.constant dense<0.000000e+00> : vector<8x128xf32>
    %66 = tpu.matmul %64, %65, %cst_36 {dimension_numbers = #tpu.dot_dimension_numbers<[1], [0], [0], [1], [0, 0, 1, 1], [], []>} : vector<8x128xf32>, vector<128x128xf32>, vector<8x128xf32> -> vector<8x128xf32>
    %c0_37 = arith.constant 0 : index
    %c0_38 = arith.constant 0 : index
    %67 = vector.load %arg5[%c0_37, %c0_38] : memref<1x128xf32, #tpu.memory_space<vmem>>, vector<1x128xf32>
    %68 = vector.broadcast %67 : vector<1x128xf32> to vector<8x128xf32>
    %69 = arith.addf %66, %68 : vector<8x128xf32>
    %c0_39 = arith.constant 0 : index
    %c0_40 = arith.constant 0 : index
    %70 = vector.load %arg6[%c0_39, %c0_40] : memref<8x128xf32, #tpu.memory_space<vmem>>, vector<8x128xf32>
    tpu.vector_store %arg6[%c0_39, %c0_40], %69 {strides = array<i32>} : memref<8x128xf32, #tpu.memory_space<vmem>>, vector<8x128xf32>,
    return
  }
}

</mosaic_0001>

<llo_original>
// kernel: tpu_custom_call.1
$region0: #{tpu_custom_call.1}
  #allocation0 [shape = 'u32[]', space=smem, size = 0x4, offset = 0x4, fixed_abs, tag = 'smem constant byte address 0x4 - core index']
  #allocation1 [shape = 'u32[72,128]{1,0:T(1,128)}', space=vmem, size = 0x9000, scoped, tag = 'internal scratch']
  #allocation2 [shape = 'f32[64,128]{1,0:T(8,128)}', space=vmem, size = 0x8000, scoped, tag = 'scratch operand']
  %s0 = inlined_call_operand.hbm [shape: f32[64,128], index: 0, kind: input, shape index: {}]
  %s1 = inlined_call_operand.hbm [shape: f32[128,128], index: 1, kind: input, shape index: {}]
  %s2 = inlined_call_operand.hbm [shape: f32[128,128], index: 2, kind: input, shape index: {}]
  %s3 = inlined_call_operand.vmem [shape: f32[1,128], index: 3, kind: input, shape index: {}]
  %s4 = inlined_call_operand.hbm [shape: f32[128,128], index: 4, kind: input, shape index: {}]
  %s5 = inlined_call_operand.vmem [shape: f32[1,128], index: 5, kind: input, shape index: {}]
  %s6 = inlined_call_operand.hbm [shape: f32[8,128], index: 6, kind: output, shape index: {}]
  %s7 = sld [smem:[#allocation0]]
  $region50: #{tpu_custom_call.1} parent=0
    _
  %s9 = ssub.s32 1, %s7
  %s10 = scalar_select 0, %s9, %s7
  $region1: #{tpu_custom_call.1} parent=0
    #allocation3 [shape = 'u8[32768]{0}', space=vmem, size = 0x8000, scoped, tag = 'input window, operand 0, single buffered']
    #allocation4 [shape = 's32[1]{0}', space=sflag, size = 0x4, scoped, tag = 'scoped memory for tpu_custom_call.1']
    #allocation5 [shape = 's32[1]{0}', space=sflag, size = 0x4, scoped, tag = 'scoped memory for tpu_custom_call.1']
    #allocation6 [shape = 'u8[65536]{0}', space=vmem, size = 0x10000, scoped, tag = 'input window, operand 1, single buffered']
    #allocation7 [shape = 's32[1]{0}', space=sflag, size = 0x4, scoped, tag = 'scoped memory for tpu_custom_call.1']
    #allocation8 [shape = 'u8[65536]{0}', space=vmem, size = 0x10000, scoped, tag = 'input window, operand 2, single buffered']
    #allocation9 [shape = 'u8[65536]{0}', space=vmem, size = 0x10000, scoped, tag = 'input window, operand 4, single buffered']
    #allocation10 [shape = 's32[1]{0}', space=sflag, size = 0x4, scoped, tag = 'scoped memory for tpu_custom_call.1']
    #allocation11 [shape = 'u8[4096]{0}', space=vmem, size = 0x1000, scoped, tag = 'output window, operand 0, single buffered']
    %11 = vsyncpa [#allocation4], 0
    %12 = vsyncpa [#allocation7], 0
    %13 = vsyncpa [#allocation10], 0
    %14 = vsyncpa [#allocation5], 0
    // Predicated region
    $region2: #{tpu_custom_call.1} parent=1 // pred_check
      _
    $region3: #{tpu_custom_call.1} parent=1 // pred_check_branch
      %16 = sbr.rel (0) target = $region5
    $region4: #{tpu_custom_call.1} parent=1 // pred_region
      %18 = vsyncadd [#allocation4], 0
      %s19 = sshll.u32 %s0, 4
      %s20 = int_to_ptr.hbm [resolvable:$true] %s19
      %s21 = sshll.u32 [#allocation3], 4
      %s22 = int_to_ptr.vmem [resolvable:$true] %s21
      %27 = dma.hbm_to_vmem [thread:$0]  %s20, 1024, %s22, [#allocation4], 128, 128, 8
    $region5: #{tpu_custom_call.1} parent=1 // pred_fallthru
      _
    // Predicated region
    $region6: #{tpu_custom_call.1} parent=1 // pred_check
      _
    $region7: #{tpu_custom_call.1} parent=1 // pred_check_branch
      %29 = sbr.rel (0) target = $region9
    $region8: #{tpu_custom_call.1} parent=1 // pred_region
      %31 = vsyncadd [#allocation7], 0
      %s32 = sshll.u32 %s1, 4
      %s33 = int_to_ptr.hbm [resolvable:$true] %s32
      %s34 = sshll.u32 [#allocation6], 4
      %s35 = int_to_ptr.vmem [resolvable:$true] %s34
      %40 = dma.hbm_to_vmem [thread:$0]  %s33, 2048, %s35, [#allocation7], 128, 128, 8
    $region9: #{tpu_custom_call.1} parent=1 // pred_fallthru
      _
    // Predicated region
    $region10: #{tpu_custom_call.1} parent=1 // pred_check
      _
    $region11: #{tpu_custom_call.1} parent=1 // pred_check_branch
      %42 = sbr.rel (0) target = $region13
    $region12: #{tpu_custom_call.1} parent=1 // pred_region
      %44 = vsyncadd [#allocation7], 0
      %s45 = sshll.u32 %s2, 4
      %s46 = int_to_ptr.hbm [resolvable:$true] %s45
      %s47 = sshll.u32 [#allocation8], 4
      %s48 = int_to_ptr.vmem [resolvable:$true] %s47
      %53 = dma.hbm_to_vmem [thread:$0]  %s46, 2048, %s48, [#allocation7], 128, 128, 8
    $region13: #{tpu_custom_call.1} parent=1 // pred_fallthru
      _
    // Predicated region
    $region14: #{tpu_custom_call.1} parent=1 // pred_check
      _
    $region15: #{tpu_custom_call.1} parent=1 // pred_check_branch
      %55 = sbr.rel (0) target = $region17
    $region16: #{tpu_custom_call.1} parent=1 // pred_region
      _
    $region17: #{tpu_custom_call.1} parent=1 // pred_fallthru
      _
    // Predicated region
    $region18: #{tpu_custom_call.1} parent=1 // pred_check
      _
    $region19: #{tpu_custom_call.1} parent=1 // pred_check_branch
      %57 = sbr.rel (0) target = $region21
    $region20: #{tpu_custom_call.1} parent=1 // pred_region
      %59 = vsyncadd [#allocation10], 0
      %s60 = sshll.u32 %s4, 4
      %s61 = int_to_ptr.hbm [resolvable:$true] %s60
      %s62 = sshll.u32 [#allocation9], 4
      %s63 = int_to_ptr.vmem [resolvable:$true] %s62
      %68 = dma.hbm_to_vmem [thread:$0]  %s61, 2048, %s63, [#allocation10], 128, 128, 8
    $region21: #{tpu_custom_call.1} parent=1 // pred_fallthru
      _
    // Predicated region
    $region22: #{tpu_custom_call.1} parent=1 // pred_check
      _
    $region23: #{tpu_custom_call.1} parent=1 // pred_check_branch
      %70 = sbr.rel (0) target = $region25
    $region24: #{tpu_custom_call.1} parent=1 // pred_region
      _
    $region25: #{tpu_custom_call.1} parent=1 // pred_fallthru
      _
    // Predicated region
    $region26: #{tpu_custom_call.1} parent=1 // pred_check
      _
    $region27: #{tpu_custom_call.1} parent=1 // pred_check_branch
      %72 = sbr.rel (0) target = $region29
    $region28: #{tpu_custom_call.1} parent=1 // pred_region
      %74 = dma.done [#allocation4], 1024
    $region29: #{tpu_custom_call.1} parent=1 // pred_fallthru
      _
    // Predicated region
    $region30: #{tpu_custom_call.1} parent=1 // pred_check
      _
    $region31: #{tpu_custom_call.1} parent=1 // pred_check_branch
      %76 = sbr.rel (0) target = $region33
    $region32: #{tpu_custom_call.1} parent=1 // pred_region
      %78 = dma.done [#allocation7], 2048
    $region33: #{tpu_custom_call.1} parent=1 // pred_fallthru
      _
    // Predicated region
    $region34: #{tpu_custom_call.1} parent=1 // pred_check
      _
    $region35: #{tpu_custom_call.1} parent=1 // pred_check_branch
      %80 = sbr.rel (0) target = $region37
    $region36: #{tpu_custom_call.1} parent=1 // pred_region
      %82 = dma.done [#allocation7], 2048
    $region37: #{tpu_custom_call.1} parent=1 // pred_fallthru
      _
    // Predicated region
    $region38: #{tpu_custom_call.1} parent=1 // pred_check
      _
    $region39: #{tpu_custom_call.1} parent=1 // pred_check_branch
      %84 = sbr.rel (0) target = $region41
    $region40: #{tpu_custom_call.1} parent=1 // pred_region
      %86 = dma.done [#allocation10], 2048
    $region41: #{tpu_custom_call.1} parent=1 // pred_fallthru
      _
    %v87 = vld [vmem:[#allocation3] sm:$0xff]
    %v88 = vld [vmem:[#allocation3 + $0x8] sm:$0xff]
    %v89 = vld [vmem:[#allocation3 + $0x10] sm:$0xff]
    %v90 = vld [vmem:[#allocation3 + $0x18] sm:$0xff]
    %v91 = vld [vmem:[#allocation3 + $0x20] sm:$0xff]
    %v92 = vld [vmem:[#allocation3 + $0x28] sm:$0xff]
    %v93 = vld [vmem:[#allocation3 + $0x30] sm:$0xff]
    %v94 = vld [vmem:[#allocation3 + $0x38] sm:$0xff]
    %v95 = vld [vmem:[#allocation6] sm:$0xff]
    %v96 = vld [vmem:[#allocation6 + $0x8] sm:$0xff]
    %v97 = vld [vmem:[#allocation6 + $0x10] sm:$0xff]
    %v98 = vld [vmem:[#allocation6 + $0x18] sm:$0xff]
    %v99 = vld [vmem:[#allocation6 + $0x20] sm:$0xff]
    %v100 = vld [vmem:[#allocation6 + $0x28] sm:$0xff]
    %v101 = vld [vmem:[#allocation6 + $0x30] sm:$0xff]
    %v102 = vld [vmem:[#allocation6 + $0x38] sm:$0xff]
    %v103 = vld [vmem:[#allocation6 + $0x40] sm:$0xff]
    %v104 = vld [vmem:[#allocation6 + $0x48] sm:$0xff]
    %v105 = vld [vmem:[#allocation6 + $0x50] sm:$0xff]
    %v106 = vld [vmem:[#allocation6 + $0x58] sm:$0xff]
    %v107 = vld [vmem:[#allocation6 + $0x60] sm:$0xff]
    %v108 = vld [vmem:[#allocation6 + $0x68] sm:$0xff]
    %v109 = vld [vmem:[#allocation6 + $0x70] sm:$0xff]
    %v110 = vld [vmem:[#allocation6 + $0x78] sm:$0xff]
    %v111 = vld [vmem:[%s3] sm:$0x1]
    %v113 = vperm.slane %v111, 0
    %115 = vmatpush.msra.mxu0 %v110
    %116 = vmatpush.msra.mxu0 %v109
    %117 = vmatpush.msra.mxu0 %v108
    %118 = vmatpush.msra.mxu0 %v107
    %119 = vmatpush.msra.mxu0 %v106
    %120 = vmatpush.msra.mxu0 %v105
    %121 = vmatpush.msra.mxu0 %v104
    %122 = vmatpush.msra.mxu0 %v103
    %123 = vmatpush.msra.mxu0 %v102
    %124 = vmatpush.msra.mxu0 %v101
    %125 = vmatpush.msra.mxu0 %v100
    %126 = vmatpush.msra.mxu0 %v99
    %127 = vmatpush.msra.mxu0 %v98
    %128 = vmatpush.msra.mxu0 %v97
    %129 = vmatpush.msra.mxu0 %v96
    %130 = vmatpush.msra.mxu0 %v95
    %131 = vmatmul.f32.gmra.mxu0 %v87
    %v132 = vpop.f32.mrf.mxu0
    %v133 = vadd.f32 %v113, %v132
    %134 = vmatmul.f32.gmra.mxu0 %v88
    %v135 = vpop.f32.mrf.mxu0
    %v136 = vadd.f32 %v113, %v135
    %137 = vmatmul.f32.gmra.mxu0 %v89
    %v138 = vpop.f32.mrf.mxu0
    %v139 = vadd.f32 %v113, %v138
    %140 = vmatmul.f32.gmra.mxu0 %v90
    %v141 = vpop.f32.mrf.mxu0
    %v142 = vadd.f32 %v113, %v141
    %143 = vmatmul.f32.gmra.mxu0 %v91
    %v144 = vpop.f32.mrf.mxu0
    %v145 = vadd.f32 %v113, %v144
    %146 = vmatmul.f32.gmra.mxu0 %v92
    %v147 = vpop.f32.mrf.mxu0
    %v148 = vadd.f32 %v113, %v147
    %149 = vmatmul.f32.gmra.mxu0 %v93
    %v150 = vpop.f32.mrf.mxu0
    %v151 = vadd.f32 %v113, %v150
    %152 = vmatmul.f32.gmra.mxu0 %v94
    %v153 = vpop.f32.mrf.mxu0
    %v154 = vadd.f32 %v113, %v153
    %155 = vdwg.mxu0
    %156 = vst [vmem:[#allocation2] sm:$0xff] %v133
    %157 = vst [vmem:[#allocation2 + $0x8] sm:$0xff] %v136
    %158 = vst [vmem:[#allocation2 + $0x10] sm:$0xff] %v139
    %159 = vst [vmem:[#allocation2 + $0x18] sm:$0xff] %v142
    %160 = vst [vmem:[#allocation2 + $0x20] sm:$0xff] %v145
    %161 = vst [vmem:[#allocation2 + $0x28] sm:$0xff] %v148
    %162 = vst [vmem:[#allocation2 + $0x30] sm:$0xff] %v151
    %163 = vst [vmem:[#allocation2 + $0x38] sm:$0xff] %v154
    %v164 = vld [vmem:[#allocation8] sm:$0xff]
    %v165 = vld [vmem:[#allocation8 + $0x8] sm:$0xff]
    %v166 = vld [vmem:[#allocation8 + $0x10] sm:$0xff]
    %v167 = vld [vmem:[#allocation8 + $0x18] sm:$0xff]
    %v168 = vld [vmem:[#allocation8 + $0x20] sm:$0xff]
    %v169 = vld [vmem:[#allocation8 + $0x28] sm:$0xff]
    %v170 = vld [vmem:[#allocation8 + $0x30] sm:$0xff]
    %v171 = vld [vmem:[#allocation8 + $0x38] sm:$0xff]
    %v172 = vld [vmem:[#allocation8 + $0x40] sm:$0xff]
    %v173 = vld [vmem:[#allocation8 + $0x48] sm:$0xff]
    %v174 = vld [vmem:[#allocation8 + $0x50] sm:$0xff]
    %v175 = vld [vmem:[#allocation8 + $0x58] sm:$0xff]
    %v176 = vld [vmem:[#allocation8 + $0x60] sm:$0xff]
    %v177 = vld [vmem:[#allocation8 + $0x68] sm:$0xff]
    %v178 = vld [vmem:[#allocation8 + $0x70] sm:$0xff]
    %v179 = vld [vmem:[#allocation8 + $0x78] sm:$0xff]
    %v180 = vld [vmem:[#allocation2] sm:$0xff]
    %181 = vmatpush.msra.mxu0 %v179
    %182 = vmatpush.msra.mxu0 %v178
    %183 = vmatpush.msra.mxu0 %v177
    %184 = vmatpush.msra.mxu0 %v176
    %185 = vmatpush.msra.mxu0 %v175
    %186 = vmatpush.msra.mxu0 %v174
    %187 = vmatpush.msra.mxu0 %v173
    %188 = vmatpush.msra.mxu0 %v172
    %189 = vmatpush.msra.mxu0 %v171
    %190 = vmatpush.msra.mxu0 %v170
    %191 = vmatpush.msra.mxu0 %v169
    %192 = vmatpush.msra.mxu0 %v168
    %193 = vmatpush.msra.mxu0 %v167
    %194 = vmatpush.msra.mxu0 %v166
    %195 = vmatpush.msra.mxu0 %v165
    %196 = vmatpush.msra.mxu0 %v164
    %197 = vmatmul.f32.gmra.mxu0 0.0
    %v198 = vpop.f32.mrf.mxu0
    %v199 = vadd.f32 0.0, %v198
    %200 = vdwg.mxu0
    %v201 = vadd.f32 %v180, %v199
    %v202 = vtanh.pop %v201
    %s203 = scalar_lea.vmem [#allocation2], 8
    %v204 = vld [vmem:[%s203] sm:$0xff]
    %205 = vmatpush.msra.mxu0 %v179
    %206 = vmatpush.msra.mxu0 %v178
    %207 = vmatpush.msra.mxu0 %v177
    %208 = vmatpush.msra.mxu0 %v176
    %209 = vmatpush.msra.mxu0 %v175
    %210 = vmatpush.msra.mxu0 %v174
    %211 = vmatpush.msra.mxu0 %v173
    %212 = vmatpush.msra.mxu0 %v172
    %213 = vmatpush.msra.mxu0 %v171
    %214 = vmatpush.msra.mxu0 %v170
    %215 = vmatpush.msra.mxu0 %v169
    %216 = vmatpush.msra.mxu0 %v168
    %217 = vmatpush.msra.mxu0 %v167
    %218 = vmatpush.msra.mxu0 %v166
    %219 = vmatpush.msra.mxu0 %v165
    %220 = vmatpush.msra.mxu0 %v164
    %221 = vmatmul.f32.gmra.mxu0 %v202
    %v222 = vpop.f32.mrf.mxu0
    %v223 = vadd.f32 0.0, %v222
    %224 = vdwg.mxu0
    %v225 = vadd.f32 %v204, %v223
    %v226 = vtanh.pop %v225
    %s227 = scalar_lea.vmem [#allocation2], 16
    %v228 = vld [vmem:[%s227] sm:$0xff]
    %229 = vmatpush.msra.mxu0 %v179
    %230 = vmatpush.msra.mxu0 %v178
    %231 = vmatpush.msra.mxu0 %v177
    %232 = vmatpush.msra.mxu0 %v176
    %233 = vmatpush.msra.mxu0 %v175
    %234 = vmatpush.msra.mxu0 %v174
    %235 = vmatpush.msra.mxu0 %v173
    %236 = vmatpush.msra.mxu0 %v172
    %237 = vmatpush.msra.mxu0 %v171
    %238 = vmatpush.msra.mxu0 %v170
    %239 = vmatpush.msra.mxu0 %v169
    %240 = vmatpush.msra.mxu0 %v168
    %241 = vmatpush.msra.mxu0 %v167
    %242 = vmatpush.msra.mxu0 %v166
    %243 = vmatpush.msra.mxu0 %v165
    %244 = vmatpush.msra.mxu0 %v164
    %245 = vmatmul.f32.gmra.mxu0 %v226
    %v246 = vpop.f32.mrf.mxu0
    %v247 = vadd.f32 0.0, %v246
    %248 = vdwg.mxu0
    %v249 = vadd.f32 %v228, %v247
    %v250 = vtanh.pop %v249
    %s251 = scalar_lea.vmem [#allocation2], 24
    %v252 = vld [vmem:[%s251] sm:$0xff]
    %253 = vmatpush.msra.mxu0 %v179
    %254 = vmatpush.msra.mxu0 %v178
    %255 = vmatpush.msra.mxu0 %v177
    %256 = vmatpush.msra.mxu0 %v176
    %257 = vmatpush.msra.mxu0 %v175
    %258 = vmatpush.msra.mxu0 %v174
    %259 = vmatpush.msra.mxu0 %v173
    %260 = vmatpush.msra.mxu0 %v172
    %261 = vmatpush.msra.mxu0 %v171
    %262 = vmatpush.msra.mxu0 %v170
    %263 = vmatpush.msra.mxu0 %v169
    %264 = vmatpush.msra.mxu0 %v168
    %265 = vmatpush.msra.mxu0 %v167
    %266 = vmatpush.msra.mxu0 %v166
    %267 = vmatpush.msra.mxu0 %v165
    %268 = vmatpush.msra.mxu0 %v164
    %269 = vmatmul.f32.gmra.mxu0 %v250
    %v270 = vpop.f32.mrf.mxu0
    %v271 = vadd.f32 0.0, %v270
    %272 = vdwg.mxu0
    %v273 = vadd.f32 %v252, %v271
    %v274 = vtanh.pop %v273
    %s275 = scalar_lea.vmem [#allocation2], 32
    %v276 = vld [vmem:[%s275] sm:$0xff]
    %277 = vmatpush.msra.mxu0 %v179
    %278 = vmatpush.msra.mxu0 %v178
    %279 = vmatpush.msra.mxu0 %v177
    %280 = vmatpush.msra.mxu0 %v176
    %281 = vmatpush.msra.mxu0 %v175
    %282 = vmatpush.msra.mxu0 %v174
    %283 = vmatpush.msra.mxu0 %v173
    %284 = vmatpush.msra.mxu0 %v172
    %285 = vmatpush.msra.mxu0 %v171
    %286 = vmatpush.msra.mxu0 %v170
    %287 = vmatpush.msra.mxu0 %v169
    %288 = vmatpush.msra.mxu0 %v168
    %289 = vmatpush.msra.mxu0 %v167
    %290 = vmatpush.msra.mxu0 %v166
    %291 = vmatpush.msra.mxu0 %v165
    %292 = vmatpush.msra.mxu0 %v164
    %293 = vmatmul.f32.gmra.mxu0 %v274
    %v294 = vpop.f32.mrf.mxu0
    %v295 = vadd.f32 0.0, %v294
    %296 = vdwg.mxu0
    %v297 = vadd.f32 %v276, %v295
    %v298 = vtanh.pop %v297
    %s299 = scalar_lea.vmem [#allocation2], 40
    %v300 = vld [vmem:[%s299] sm:$0xff]
    %301 = vmatpush.msra.mxu0 %v179
    %302 = vmatpush.msra.mxu0 %v178
    %303 = vmatpush.msra.mxu0 %v177
    %304 = vmatpush.msra.mxu0 %v176
    %305 = vmatpush.msra.mxu0 %v175
    %306 = vmatpush.msra.mxu0 %v174
    %307 = vmatpush.msra.mxu0 %v173
    %308 = vmatpush.msra.mxu0 %v172
    %309 = vmatpush.msra.mxu0 %v171
    %310 = vmatpush.msra.mxu0 %v170
    %311 = vmatpush.msra.mxu0 %v169
    %312 = vmatpush.msra.mxu0 %v168
    %313 = vmatpush.msra.mxu0 %v167
    %314 = vmatpush.msra.mxu0 %v166
    %315 = vmatpush.msra.mxu0 %v165
    %316 = vmatpush.msra.mxu0 %v164
    %317 = vmatmul.f32.gmra.mxu0 %v298
    %v318 = vpop.f32.mrf.mxu0
    %v319 = vadd.f32 0.0, %v318
    %320 = vdwg.mxu0
    %v321 = vadd.f32 %v300, %v319
    %v322 = vtanh.pop %v321
    %s323 = scalar_lea.vmem [#allocation2], 48
    %v324 = vld [vmem:[%s323] sm:$0xff]
    %325 = vmatpush.msra.mxu0 %v179
    %326 = vmatpush.msra.mxu0 %v178
    %327 = vmatpush.msra.mxu0 %v177
    %328 = vmatpush.msra.mxu0 %v176
    %329 = vmatpush.msra.mxu0 %v175
    %330 = vmatpush.msra.mxu0 %v174
    %331 = vmatpush.msra.mxu0 %v173
    %332 = vmatpush.msra.mxu0 %v172
    %333 = vmatpush.msra.mxu0 %v171
    %334 = vmatpush.msra.mxu0 %v170
    %335 = vmatpush.msra.mxu0 %v169
    %336 = vmatpush.msra.mxu0 %v168
    %337 = vmatpush.msra.mxu0 %v167
    %338 = vmatpush.msra.mxu0 %v166
    %339 = vmatpush.msra.mxu0 %v165
    %340 = vmatpush.msra.mxu0 %v164
    %341 = vmatmul.f32.gmra.mxu0 %v322
    %v342 = vpop.f32.mrf.mxu0
    %v343 = vadd.f32 0.0, %v342
    %344 = vdwg.mxu0
    %v345 = vadd.f32 %v324, %v343
    %v346 = vtanh.pop %v345
    %s347 = scalar_lea.vmem [#allocation2], 56
    %v348 = vld [vmem:[%s347] sm:$0xff]
    %349 = vmatpush.msra.mxu0 %v179
    %350 = vmatpush.msra.mxu0 %v178
    %351 = vmatpush.msra.mxu0 %v177
    %352 = vmatpush.msra.mxu0 %v176
    %353 = vmatpush.msra.mxu0 %v175
    %354 = vmatpush.msra.mxu0 %v174
    %355 = vmatpush.msra.mxu0 %v173
    %356 = vmatpush.msra.mxu0 %v172
    %357 = vmatpush.msra.mxu0 %v171
    %358 = vmatpush.msra.mxu0 %v170
    %359 = vmatpush.msra.mxu0 %v169
    %360 = vmatpush.msra.mxu0 %v168
    %361 = vmatpush.msra.mxu0 %v167
    %362 = vmatpush.msra.mxu0 %v166
    %363 = vmatpush.msra.mxu0 %v165
    %364 = vmatpush.msra.mxu0 %v164
    %365 = vmatmul.f32.gmra.mxu0 %v346
    %v366 = vpop.f32.mrf.mxu0
    %v367 = vadd.f32 0.0, %v366
    %368 = vdwg.mxu0
    %v369 = vadd.f32 %v348, %v367
    %v370 = vtanh.pop %v369
    %v371 = vld [vmem:[#allocation9] sm:$0xff]
    %v372 = vld [vmem:[#allocation9 + $0x8] sm:$0xff]
    %v373 = vld [vmem:[#allocation9 + $0x10] sm:$0xff]
    %v374 = vld [vmem:[#allocation9 + $0x18] sm:$0xff]
    %v375 = vld [vmem:[#allocation9 + $0x20] sm:$0xff]
    %v376 = vld [vmem:[#allocation9 + $0x28] sm:$0xff]
    %v377 = vld [vmem:[#allocation9 + $0x30] sm:$0xff]
    %v378 = vld [vmem:[#allocation9 + $0x38] sm:$0xff]
    %v379 = vld [vmem:[#allocation9 + $0x40] sm:$0xff]
    %v380 = vld [vmem:[#allocation9 + $0x48] sm:$0xff]
    %v381 = vld [vmem:[#allocation9 + $0x50] sm:$0xff]
    %v382 = vld [vmem:[#allocation9 + $0x58] sm:$0xff]
    %v383 = vld [vmem:[#allocation9 + $0x60] sm:$0xff]
    %v384 = vld [vmem:[#allocation9 + $0x68] sm:$0xff]
    %v385 = vld [vmem:[#allocation9 + $0x70] sm:$0xff]
    %v386 = vld [vmem:[#allocation9 + $0x78] sm:$0xff]
    %v387 = vld [vmem:[%s5] sm:$0x1]
    %v389 = vperm.slane %v387, 0
    %391 = vmatpush.msra.mxu0 %v386
    %392 = vmatpush.msra.mxu0 %v385
    %393 = vmatpush.msra.mxu0 %v384
    %394 = vmatpush.msra.mxu0 %v383
    %395 = vmatpush.msra.mxu0 %v382
    %396 = vmatpush.msra.mxu0 %v381
    %397 = vmatpush.msra.mxu0 %v380
    %398 = vmatpush.msra.mxu0 %v379
    %399 = vmatpush.msra.mxu0 %v378
    %400 = vmatpush.msra.mxu0 %v377
    %401 = vmatpush.msra.mxu0 %v376
    %402 = vmatpush.msra.mxu0 %v375
    %403 = vmatpush.msra.mxu0 %v374
    %404 = vmatpush.msra.mxu0 %v373
    %405 = vmatpush.msra.mxu0 %v372
    %406 = vmatpush.msra.mxu0 %v371
    %407 = vmatmul.f32.gmra.mxu0 %v370
    %v408 = vpop.f32.mrf.mxu0
    %v409 = vadd.f32 %v389, %v408
    %410 = vdwg.mxu0
    %411 = vst [vmem:[#allocation11] sm:$0xff] %v409
    // Predicated region
    $region42: #{tpu_custom_call.1} parent=1 // pred_check
      _
    $region43: #{tpu_custom_call.1} parent=1 // pred_check_branch
      %413 = sbr.rel (0) target = $region45
    $region44: #{tpu_custom_call.1} parent=1 // pred_region
      %415 = vsyncadd [#allocation5], 0
      %s417 = sshll.u32 [#allocation11], 4
      %s418 = int_to_ptr.vmem [resolvable:$true] %s417
      %s419 = sshll.u32 %s6, 4
      %s420 = int_to_ptr.hbm [resolvable:$true] %s419
      %422 = dma.vmem_to_hbm [thread:$0]  %s418, 128, %s420, [#allocation5]
    $region45: #{tpu_custom_call.1} parent=1 // pred_fallthru
      _
    // Predicated region
    $region46: #{tpu_custom_call.1} parent=1 // pred_check
      _
    $region47: #{tpu_custom_call.1} parent=1 // pred_check_branch
      %424 = sbr.rel (0) target = $region49
    $region48: #{tpu_custom_call.1} parent=1 // pred_region
      %426 = dma.done [#allocation5], 128
    $region49: #{tpu_custom_call.1} parent=1 // pred_fallthru
      _
    %427 = vsyncpa [#allocation4], 1
    %428 = vsyncpa [#allocation7], 1
    %429 = vsyncpa [#allocation10], 1
    %430 = vsyncpa [#allocation5], 1

</llo_original>
